<compile_context>
chip_gen: v6e
topology: v6e:2x2x1
jax: 0.10.0
libtpu: 0.0.40
codegen_flags: <defaults>
</compile_context>

<pallas_src>
import functools
import warnings

import jax
import jax.numpy as jnp
from jax.experimental import pallas as pl
from jax.experimental.pallas import tpu as pltpu

LANE = 128
SUBLANE = 8
_TARGET_TILE_BYTES = 4 * 1024 * 1024    # ~4 MiB per block (near-flat tiling curve past 2 MiB)
_VMEM_LIMIT_BYTES = 32 * 1024 * 1024    # explicit scoped-VMEM budget; fits every generation
_MIN_PALLAS_BYTES = 256 * 1024          # below this, plain fused jnp.where is faster


def _threshold_kernel(x_ref, params_ref, o_ref):
    """Elementwise y = where(x > t, x, v) on one VMEM block."""
    x = x_ref[...]
    # params live in SMEM as float32; cast once to the tensor dtype (matches
    # PyTorch's scalar -> tensor-dtype conversion, modulo the f32 staging noted
    # in the module docstring).
    t = params_ref[0].astype(x.dtype)
    v = params_ref[1].astype(x.dtype)
    o_ref[...] = jnp.where(x > t, x, v)


def _round_up(v, m):
    return -(-v // m) * m


def _block_rows(rows, itemsize):
    """~_TARGET_TILE_BYTES per block, multiple of 8 sublanes, and >= 2 grid steps."""
    max_rows = max(SUBLANE,
                   (_TARGET_TILE_BYTES // (LANE * itemsize)) // SUBLANE * SUBLANE)
    # Cap at half the rows (rounded up to a sublane multiple) so the grid has at
    # least 2 steps -> dimension_semantics=("parallel",) can use both TCs on v7x.
    two_step = max(SUBLANE, _round_up(pl.cdiv(rows, 2), SUBLANE))
    return min(max_rows, two_step)


def _call_2d(x2d, params, block_rows, alias_input):
    rows, lane = x2d.shape
    return pl.pallas_call(
        _threshold_kernel,
        out_shape=jax.ShapeDtypeStruct((rows, lane), x2d.dtype),
        grid=(pl.cdiv(rows, block_rows),),
        in_specs=[
            pl.BlockSpec((block_rows, lane), lambda i: (i, 0)),
            pl.BlockSpec(memory_space=pltpu.MemorySpace.SMEM),  # scalar params
        ],
        out_specs=pl.BlockSpec((block_rows, lane), lambda i: (i, 0)),
        input_output_aliases=({0: 0} if alias_input else {}),
        compiler_params=pltpu.CompilerParams(
            dimension_semantics=("parallel",),
            vmem_limit_bytes=_VMEM_LIMIT_BYTES,
        ),
    )(x2d, params)


def _aligned_impl(x, params, block_rows, alias_input):
    # n % 128 == 0: contiguous reshape is a bitcast inside jit -> zero extra copies.
    rows = x.size // LANE
    out2d = _call_2d(x.reshape(rows, LANE), params, block_rows, alias_input)
    return out2d.reshape(x.shape)


def _ragged_impl(x, params, block_rows, alias_input):
    # n % 128 != 0: pad up to the next lane multiple (< 128 extra elements) and
    # slice back.  Pad + slice are each an extra HBM pass; accepted + documented
    # tradeoff — this path only triggers for non-lane-aligned element counts.
    n = x.size
    rows = pl.cdiv(n, LANE)
    x2d = jnp.pad(x.reshape(-1), (0, rows * LANE - n)).reshape(rows, LANE)
    # The padded temporary is only consumed by the kernel, so aliasing it to the
    # output is always safe and saves one full-size HBM allocation.
    out2d = _call_2d(x2d, params, block_rows, alias_input)
    return out2d.reshape(-1)[:n].reshape(x.shape)


_aligned_jit = jax.jit(_aligned_impl, static_argnames=("block_rows", "alias_input"))
_aligned_jit_donated = jax.jit(_aligned_impl,
                               static_argnames=("block_rows", "alias_input"),
                               donate_argnums=(0,))
_ragged_jit = jax.jit(_ragged_impl, static_argnames=("block_rows", "alias_input"))


def threshold(x, thresh, value, *, donate=False, min_pallas_bytes=_MIN_PALLAS_BYTES):
    """Pallas TPU implementation of torch.nn.Threshold forward.

    donate=True lets the result reuse x's buffer (caller must not use x afterwards)
    — the functional analogue of PyTorch's inplace=True.
    """
    x = jnp.asarray(x)
    n = x.size
    if n == 0:
        return x
    dtype = x.dtype
    itemsize = jnp.dtype(dtype).itemsize

    # Small-input fallback: a single-block pallas_call is dominated by custom-call
    # + DMA-prime latency; XLA fuses the tiny elementwise op for free, and we avoid
    # one Mosaic compile per distinct small shape.
    if n * itemsize < min_pallas_bytes:
        t = jnp.asarray(thresh, dtype=dtype)
        v = jnp.asarray(value, dtype=dtype)
        return jnp.where(x > t, x, v)

    # Scalars stay as runtime values (SMEM operand) -> no recompile per new value.
    params = jnp.asarray([thresh, value], dtype=jnp.float32)

    if n % LANE == 0:
        rows = n // LANE
        br = _block_rows(rows, itemsize)
        if donate:
            return _aligned_jit_donated(x, params, block_rows=br, alias_input=True)
        return _aligned_jit(x, params, block_rows=br, alias_input=False)

    rows = pl.cdiv(n, LANE)
    br = _block_rows(rows, itemsize)
    return _ragged_jit(x, params, block_rows=br, alias_input=True)


if __name__ == "__main__":
    key = jax.random.PRNGKey(0)
    thresh_val = 0.1
    fill_value = 20.0

    def ref_fn(a):
        return jnp.where(a > jnp.asarray(thresh_val, a.dtype),
                         a, jnp.asarray(fill_value, a.dtype))

    k1, k2, k3 = jax.random.split(key, 3)

    # 1) Canonical small shape, forced through the Pallas kernel (2-step grid).
    x_small = jax.random.normal(k1, (2, 4, 16, 16), dtype=jnp.float32)
    out_small = jax.block_until_ready(
        threshold(x_small, thresh_val, fill_value, min_pallas_bytes=0))
    assert out_small.shape == x_small.shape and out_small.dtype == x_small.dtype
    assert jnp.array_equal(out_small, ref_fn(x_small))

    # 2) Same shape via the default small-input fallback path.
    out_fb = jax.block_until_ready(threshold(x_small, thresh_val, fill_value))
    assert jnp.array_equal(out_fb, ref_fn(x_small))

    # 3) Larger lane-aligned tensor -> multi-block pipelined grid.
    x_big = jax.random.normal(k2, (8, 4, 64, 128), dtype=jnp.float32)
    out_big = jax.block_until_ready(threshold(x_big, thresh_val, fill_value))
    assert jnp.array_equal(out_big, ref_fn(x_big))

    # 4) Ragged total element count (n % 128 != 0) -> padded path.
    x_rag = jax.random.normal(k3, (3, 7, 55, 59), dtype=jnp.float32)
    out_rag = jax.block_until_ready(threshold(x_rag, thresh_val, fill_value))
    assert out_rag.shape == x_rag.shape
    assert jnp.array_equal(out_rag, ref_fn(x_rag))

    # 5) Donated input: output reuses x's HBM buffer (inplace=True analogue).
    x_don = jax.random.normal(k2, (8, 4, 64, 128), dtype=jnp.float32)
    ref_don = ref_fn(x_don)
    with warnings.catch_warnings():
        warnings.simplefilter("ignore")  # donation-usability warnings are advisory
        out_don = jax.block_until_ready(
            threshold(x_don, thresh_val, fill_value, donate=True))
    assert jnp.array_equal(out_don, ref_don)

    print("KERNEL_OK")
</pallas_src>

<mosaic_0001>
module attributes {stable_mosaic.version = 11 : i64} {
  func.func @_threshold_kernel(%arg0: i32, %arg1: memref<8x128xf32, #tpu.memory_space<vmem>>, %arg2: memref<2xf32, #tpu.memory_space<smem>>, %arg3: memref<8x128xf32, #tpu.memory_space<vmem>>) attributes {dimension_semantics = [#tpu.dimension_semantics<parallel>], iteration_bounds = array<i64: 2>, scalar_prefetch = 0 : i64, scratch_operands = 0 : i64, tpu.core_type = #tpu.core_type<tc>, window_params = [{transform_indices = @transform_0, window_bounds = array<i64: 8, 128>}, {transform_indices = @transform_1, window_bounds = array<i64: 2>}, {transform_indices = @transform_2, window_bounds = array<i64: 8, 128>}]} {
    %c0 = arith.constant 0 : index
    %c0_0 = arith.constant 0 : index
    %0 = vector.load %arg1[%c0, %c0_0] : memref<8x128xf32, #tpu.memory_space<vmem>>, vector<8x128xf32>
    %c0_1 = arith.constant 0 : index
    %1 = memref.load %arg2[%c0_1] : memref<2xf32, #tpu.memory_space<smem>>
    %c1 = arith.constant 1 : index
    %2 = memref.load %arg2[%c1] : memref<2xf32, #tpu.memory_space<smem>>
    %3 = vector.broadcast %1 : f32 to vector<8x128xf32>
    %4 = arith.cmpf ogt, %0, %3 : vector<8x128xf32>
    %5 = vector.broadcast %2 : f32 to vector<8x128xf32>
    %6 = arith.select %4, %0, %5 : vector<8x128xi1>, vector<8x128xf32>
    %c0_2 = arith.constant 0 : index
    %c0_3 = arith.constant 0 : index
    %7 = vector.load %arg3[%c0_2, %c0_3] : memref<8x128xf32, #tpu.memory_space<vmem>>, vector<8x128xf32>
    tpu.vector_store %arg3[%c0_2, %c0_3], %6 {strides = array<i32>} : memref<8x128xf32, #tpu.memory_space<vmem>>, vector<8x128xf32>,
    return
  }
  func.func @transform_0(%arg0: i32) -> (i32, i32) {
    %c0_i32 = arith.constant 0 : i32
    %c0_i32_0 = arith.constant 0 : i32
    return %arg0, %c0_i32 : i32, i32
  }
  func.func @transform_1(%arg0: i32) -> i32 {
    %c0_i32 = arith.constant 0 : i32
    %c0_i32_0 = arith.constant 0 : i32
    return %c0_i32 : i32
  }
  func.func @transform_2(%arg0: i32) -> (i32, i32) {
    %c0_i32 = arith.constant 0 : i32
    %c0_i32_0 = arith.constant 0 : i32
    return %arg0, %c0_i32 : i32, i32
  }
}

</mosaic_0001>

<llo_original>
// kernel: _aligned_impl.1
$region0: #{_aligned_impl.1}
  #allocation0 [shape = 'u32[]', space=smem, size = 0x4, offset = 0x4, fixed_abs, tag = 'smem constant byte address 0x4 - core index']
  #allocation1 [shape = 'u32[144,128]{1,0:T(1,128)}', space=vmem, size = 0x12000, scoped, tag = 'internal scratch']
  %s0 = inlined_call_operand.vmem [shape: f32[16,128], index: 0, kind: input, shape index: {}]
  %s1 = inlined_call_operand.vmem [shape: f32[2], index: 1, kind: input, shape index: {}]
  %s2 = inlined_call_operand.vmem [shape: f32[16,128], index: 2, kind: output, shape index: {}]
  %s3 = sld [smem:[#allocation0]]
  $region45: #{_aligned_impl.1} parent=0
    _
  %s5 = ssub.s32 1, %s3
  %s6 = scalar_select 0, %s5, %s3
  $region1: #{_aligned_impl.1} parent=0
    #allocation2 [shape = 'u8[512]{0}', space=smem, size = 0x200, scoped, tag = 'input window, operand 1, single buffered']
    #allocation3 [shape = 's32[2]{0}', space=sflag, size = 0x8, scoped, tag = 'scoped memory for _aligned_impl.1']
    %7 = vsyncpa [#allocation3], 0
    loop: start=0, step=1, limit=4
    $region2: #{_aligned_impl.1} parent=1 // loop_pre_header
      _
    $region3: #{_aligned_impl.1} parent=1 // loop_header
      %s9 = sphi 0, %s13
      %p10 = scmp.ge.s32.totalorder %s9, 4
      %s19 = sphi 0, %s21
      %s22 = sphi 0, %s19
      %s23 = sphi 0, %s22
      %s39 = sphi 0, %s23
      %s43 = sphi 0, %s43
      %s45 = sphi 0, %s43
      %s46 = sphi 0, %s45
      %s60 = sphi 0, %s46
      %s66 = sphi 0, %s68
      %s69 = sphi 0, %s66
      %s70 = sphi 0, %s69
      %s86 = sphi 0, %s70
    $region4: #{_aligned_impl.1} parent=1 // loop_header_branch
      %12 = sbr.rel (%p10) target = $region8
    $region5: #{_aligned_impl.1} parent=1 // loop_body
      %s14 = ssub.s32 %s9, 1
      %s15 = ssub.s32 %s9, 2
      %s16 = sadd.s32 %s9, 1
      %s17 = ssub.s32 %s9, %s16
      %p18 = scmp.eq.s32.totalorder %s17, 0
      %s20 = sadd.s32 %s19, 1
      %s21 = scalar_select %p18, %s19, %s20
      %p24 = pneg %p18
      %p25 = scmp.eq.s32.totalorder %s9, 1
      %p26 = por %p24, %p25
      %p27 = scmp.ne.s32.totalorder %s19, %s22
      %p28 = scmp.eq.s32.totalorder %s9, 0
      %p29 = por %p27, %p28
      %p30 = scmp.ne.s32.totalorder %s19, %s22
      %p31 = scmp.eq.s32.totalorder %s14, 1
      %p32 = por %p30, %p31
      %p33 = scmp.ne.s32.totalorder %s22, %s23
      %p34 = scmp.eq.s32.totalorder %s14, 0
      %p35 = por %p33, %p34
      %p36 = scmp.ne.s32.totalorder %s22, %s23
      %p37 = scmp.eq.s32.totalorder %s15, 1
      %p38 = por %p36, %p37
      %p40 = scmp.ne.s32.totalorder %s23, %s39
      %p41 = scmp.eq.s32.totalorder %s15, 0
      %p42 = por %p40, %p41
      %s44 = sadd.s32 %s43, 1
      %p47 = scmp.eq.s32.totalorder %s9, 1
      %p48 = scmp.ne.s32.totalorder %s43, %s45
      %p49 = scmp.eq.s32.totalorder %s9, 0
      %p50 = por %p48, %p49
      %p51 = scmp.ne.s32.totalorder %s43, %s45
      %p52 = scmp.eq.s32.totalorder %s14, 1
      %p53 = por %p51, %p52
      %p54 = scmp.ne.s32.totalorder %s45, %s46
      %p55 = scmp.eq.s32.totalorder %s14, 0
      %p56 = por %p54, %p55
      %p57 = scmp.ne.s32.totalorder %s45, %s46
      %p58 = scmp.eq.s32.totalorder %s15, 1
      %p59 = por %p57, %p58
      %p61 = scmp.ne.s32.totalorder %s46, %s60
      %p62 = scmp.eq.s32.totalorder %s15, 0
      %p63 = por %p61, %p62
      %s64 = ssub.s32 %s9, %s16
      %p65 = scmp.eq.s32.totalorder %s64, 0
      %s67 = sadd.s32 %s66, 1
      %s68 = scalar_select %p65, %s66, %s67
      %p71 = pneg %p65
      %p72 = scmp.eq.s32.totalorder %s9, 1
      %p73 = por %p71, %p72
      %p74 = scmp.ne.s32.totalorder %s66, %s69
      %p75 = scmp.eq.s32.totalorder %s9, 0
      %p76 = por %p74, %p75
      %p77 = scmp.ne.s32.totalorder %s66, %s69
      %p78 = scmp.eq.s32.totalorder %s14, 1
      %p79 = por %p77, %p78
      %p80 = scmp.ne.s32.totalorder %s69, %s70
      %p81 = scmp.eq.s32.totalorder %s14, 0
      %p82 = por %p80, %p81
      %p83 = scmp.ne.s32.totalorder %s69, %s70
      %p84 = scmp.eq.s32.totalorder %s15, 1
      %p85 = por %p83, %p84
      %p87 = scmp.ne.s32.totalorder %s70, %s86
      %p88 = scmp.eq.s32.totalorder %s15, 0
      %p89 = por %p87, %p88
      %p90 = scmp.le.s32.totalorder 1, %s9
      %p91 = scmp.lt.s32.totalorder %s9, 3
      %p92 = pnand %p90, %p91
      %p93 = pneg %p92
      // Predicated region
      $region9: #{_aligned_impl.1} parent=5 // pred_check
        _
      $region10: #{_aligned_impl.1} parent=5 // pred_check_branch
        %95 = sbr.rel (%p92) target = $region12
      $region11: #{_aligned_impl.1} parent=5 // pred_region
        %s96 = ssub.s32 %s9, 1
        // Predicated region
        $region13: #{_aligned_impl.1} parent=11 // pred_check
          %p97 = pneg %p56
        $region14: #{_aligned_impl.1} parent=11 // pred_check_branch
          %99 = sbr.rel (%p97) target = $region16
        $region15: #{_aligned_impl.1} parent=11 // pred_region
          %s101 = ssub.s32 16, 16
          %102 = vsyncadd [#allocation3], %s101
          %s104 = sshll.u32 %s1, 4
          %s105 = int_to_ptr.vmem [resolvable:$true] %s104
          %107 = dma.vmem_to_smem %s105, 16, [#allocation2], [#allocation3]
        $region16: #{_aligned_impl.1} parent=11 // pred_fallthru
          _
      $region12: #{_aligned_impl.1} parent=5 // pred_fallthru
        _
      %p108 = scmp.lt.s32.totalorder %s9, 2
      // Predicated region
      $region17: #{_aligned_impl.1} parent=5 // pred_check
        %p109 = pneg %p108
      $region18: #{_aligned_impl.1} parent=5 // pred_check_branch
        %111 = sbr.rel (%p109) target = $region20
      $region19: #{_aligned_impl.1} parent=5 // pred_region
        // Predicated region
        $region21: #{_aligned_impl.1} parent=19 // pred_check
          %p112 = pneg %p29
        $region22: #{_aligned_impl.1} parent=19 // pred_check_branch
          %114 = sbr.rel (%p112) target = $region24
        $region23: #{_aligned_impl.1} parent=19 // pred_region
          %p115 = scmp.lt.s32.totalorder %s9, 1
          %s116 = scalar_select %p115, %s9, 1
          %s117 = smul.addr %s116, 8
          %s118 = scalar_lea.vmem %s0, %s117
        $region24: #{_aligned_impl.1} parent=19 // pred_fallthru
          _
      $region20: #{_aligned_impl.1} parent=5 // pred_fallthru
        _
      %p119 = scmp.le.s32.totalorder 1, %s9
      %p120 = scmp.lt.s32.totalorder %s9, 3
      %p121 = pnand %p119, %p120
      %p122 = pneg %p121
      // Predicated region
      $region25: #{_aligned_impl.1} parent=5 // pred_check
        _
      $region26: #{_aligned_impl.1} parent=5 // pred_check_branch
        %124 = sbr.rel (%p121) target = $region28
      $region27: #{_aligned_impl.1} parent=5 // pred_region
        %s125 = ssub.s32 %s9, 1
        // Predicated region
        $region29: #{_aligned_impl.1} parent=27 // pred_check
          %p126 = pneg %p56
        $region30: #{_aligned_impl.1} parent=27 // pred_check_branch
          %128 = sbr.rel (%p126) target = $region32
        $region31: #{_aligned_impl.1} parent=27 // pred_region
          %129 = dma.done [#allocation3], 16
        $region32: #{_aligned_impl.1} parent=27 // pred_fallthru
          _
        %130 = sfence
        %p131 = scmp.lt.s32.totalorder %s14, 1
        %s132 = scalar_select %p131, %s14, 1
        %s133 = smul.addr %s132, 8
        %s134 = scalar_lea.vmem %s0, %s133
        %p135 = pneg %p35
        %p136 = pneg %p32
        %p137 = pneg %p56
        %p138 = pneg %p53
        %p139 = pneg %p82
        %p140 = pneg %p79
        %p141 = scmp.lt.s32.totalorder %s14, 1
        %s142 = scalar_select %p141, %s14, 1
        %s143 = smul.addr %s142, 8
        %s144 = scalar_lea.vmem %s2, %s143
        %p145 = scmp.lt.s32.totalorder %s14, 1
        %s146 = scalar_select %p145, %s14, 1
        %s147 = smul.addr %s146, 8
        %s148 = scalar_lea.vmem %s0, %s147
        %p149 = scmp.lt.s32.totalorder %s14, 1
        %s150 = scalar_select %p149, %s14, 1
        %s151 = smul.addr %s150, 8
        %s152 = scalar_lea.vmem %s2, %s151
        %v153 = vld [vmem:[%s148] sm:$0xff]
        %s154 = sld [smem:[#allocation2]]
        %s155 = sld [smem:[#allocation2 + $0x1]]
        %v156 = vstv %s154
        %vm157 = vcmp.gt.f32.partialorder %v153, %v156
        %v158 = vstv %s155
        %v159 = vsel %vm157, %v153, %v158
        %160 = vst [vmem:[%s152] sm:$0xff] %v159
        %p161 = scmp.lt.s32.totalorder %s14, 1
        %s162 = scalar_select %p161, %s14, 1
        %s163 = smul.addr %s162, 8
        %s164 = scalar_lea.vmem %s2, %s163
        // Predicated region
        $region33: #{_aligned_impl.1} parent=27 // pred_check
          %p165 = pneg %p79
        $region34: #{_aligned_impl.1} parent=27 // pred_check_branch
          %167 = sbr.rel (%p165) target = $region36
        $region35: #{_aligned_impl.1} parent=27 // pred_region
          _
        $region36: #{_aligned_impl.1} parent=27 // pred_fallthru
          _
      $region28: #{_aligned_impl.1} parent=5 // pred_fallthru
        _
      %p168 = scmp.le.s32.totalorder 2, %s9
      // Predicated region
      $region37: #{_aligned_impl.1} parent=5 // pred_check
        %p169 = pneg %p168
      $region38: #{_aligned_impl.1} parent=5 // pred_check_branch
        %171 = sbr.rel (%p169) target = $region40
      $region39: #{_aligned_impl.1} parent=5 // pred_region
        %s172 = ssub.s32 %s9, 2
        // Predicated region
        $region41: #{_aligned_impl.1} parent=39 // pred_check
          %p173 = pneg %p85
        $region42: #{_aligned_impl.1} parent=39 // pred_check_branch
          %175 = sbr.rel (%p173) target = $region44
        $region43: #{_aligned_impl.1} parent=39 // pred_region
          %p176 = scmp.lt.s32.totalorder %s15, 1
          %s177 = scalar_select %p176, %s15, 1
          %s178 = smul.addr %s177, 8
          %s179 = scalar_lea.vmem %s2, %s178
        $region44: #{_aligned_impl.1} parent=39 // pred_fallthru
          _
      $region40: #{_aligned_impl.1} parent=5 // pred_fallthru
        _
    $region6: #{_aligned_impl.1} parent=1 // loop_footer
      %s13 = sadd.s32 1, %s9
    $region7: #{_aligned_impl.1} parent=1 // loop_footer_branch
      %8 = sbr.rel target = $region3
    $region8: #{_aligned_impl.1} parent=1 // loop_exit
      _
    %180 = vsyncpa [#allocation3], 1
    %s181 = scalar_lea.sflag [#allocation3], 1
    %182 = vsyncpa %s181, 1

</llo_original>
